<compile_context>
chip_gen: v5e
topology: v5e:2x2
jax: 0.10.0
libtpu: 0.0.40
codegen_flags: <defaults>
</compile_context>

<pallas_src>
import functools

import jax
import jax.numpy as jnp
from jax.experimental import pallas as pl
from jax.experimental.pallas import tpu as pltpu


def _round_up(n: int, m: int) -> int:
    return ((n + m - 1) // m) * m


def _moe_kernel(x_ref, wf_ref, gb_ref, be_ref, out_ref, acc_ref, *,
                threshold, num_experts, d_out):
    E = num_experts
    eo = E * d_out

    x = x_ref[...]                                              # (tm, D) bf16

    # One lane-dense bf16 MXU matmul produces every expert's (pre-bias) output
    # AND the gate logits: columns [0, E*Dout) are experts, [E*Dout, +E) gate.
    y_all = jnp.dot(x, wf_ref[...],
                    preferred_element_type=jnp.float32)         # (tm, E*Dout+E) f32

    # ---- threshold gating (f32, divide-free decision) -----------------------
    logits = y_all[:, eo:eo + E] + gb_ref[...]                  # (tm, E)
    m = jnp.max(logits, axis=-1, keepdims=True)
    ex = jnp.exp(logits - m)                                    # EUP
    denom = jnp.sum(ex, axis=-1, keepdims=True)
    #   softmax(l)_i >= t  <=>  ex_i >= t * denom   (exact, no reciprocal)
    sel = (ex >= threshold * denom).astype(jnp.float32)
    masked = ex * sel
    msum = jnp.sum(masked, axis=-1, keepdims=True)
    # rows with no expert above threshold -> weights stay all-zero (matches ref)
    msum = jnp.where(msum == 0.0, jnp.ones_like(msum), msum)
    # softmax denom cancels in the renorm; only reciprocal left -> EUP approx.
    w = masked * pl.reciprocal(msum, approx=True)               # (tm, E)

    # ---- experts: biases folded into one tiny matmul, then weighted sum -----
    acc_ref[...] = jnp.dot(w, be_ref[...],
                           preferred_element_type=jnp.float32)  # sum_e w_e * b_e
    for e in range(E):                                          # static unroll, E small
        acc_ref[...] += w[:, e:e + 1] * y_all[:, e * d_out:(e + 1) * d_out]
    out_ref[...] = acc_ref[...].astype(out_ref.dtype)

    # TODO(synk): the load-balancing layer_loss (only computed when
    # inputs.requires_grad in the PyTorch module) is a training-time side
    # output, not part of the returned forward value, and is not computed here.


def threshold_moe(inputs, gate_w, gate_b, expert_w, expert_b, threshold, *,
                  tm=256):
    """inputs: (..., D); gate_w: (D, E); gate_b: (E,);
       expert_w: (E, D, Dout); expert_b: (E, Dout)."""
    D = inputs.shape[-1]
    E, D2, Dout = expert_w.shape
    assert D2 == D and gate_w.shape == (D, E)

    flat = inputs.reshape(-1, D)
    T = flat.shape[0]

    # Token tile: big (256) for real workloads, shrunk (multiple of 8) for tiny
    # demos so we don't pad 16 tokens up to 256.  Pad T instead of asserting.
    tm = max(8, (tm // 8) * 8)
    tm_eff = min(tm, _round_up(T, 8))
    Tpad = _round_up(T, tm_eff)
    if Tpad != T:
        flat = jnp.pad(flat, ((0, Tpad - T), (0, 0)))

    # bf16 operands for the MXU; accumulation stays f32 inside the kernel.
    x_bf = flat.astype(jnp.bfloat16)
    # Fused weight: [ expert_w flattened to (D, E*Dout) | gate_w (D, E) ].
    ew_flat = jnp.transpose(expert_w, (1, 0, 2)).reshape(D, E * Dout)
    fused_w = jnp.concatenate([ew_flat, gate_w], axis=1).astype(jnp.bfloat16)
    Nf = E * Dout + E

    gate_b2 = gate_b.reshape(1, E).astype(jnp.float32)
    expert_b2 = expert_b.astype(jnp.float32)                    # (E, Dout)

    kernel = functools.partial(_moe_kernel, threshold=float(threshold),
                               num_experts=E, d_out=Dout)

    n_tiles = Tpad // tm_eff
    cost = pl.CostEstimate(
        flops=2 * Tpad * D * Nf + 2 * Tpad * E * Dout,
        transcendentals=Tpad * E,
        bytes_accessed=(Tpad * D * 2 + D * Nf * 2 + E * 4 + E * Dout * 4
                        + Tpad * Dout * 4),
    )

    out = pl.pallas_call(
        kernel,
        out_shape=jax.ShapeDtypeStruct((Tpad, Dout), jnp.float32),
        grid_spec=pltpu.PrefetchScalarGridSpec(
            num_scalar_prefetch=0,
            grid=(n_tiles,),
            in_specs=[
                pl.BlockSpec((tm_eff, D), lambda i: (i, 0)),     # x tile (bf16)
                pl.BlockSpec((D, Nf), lambda i: (0, 0)),         # fused weights (bf16)
                pl.BlockSpec((1, E), lambda i: (0, 0)),          # gate bias (f32)
                pl.BlockSpec((E, Dout), lambda i: (0, 0)),       # expert biases (f32)
            ],
            out_specs=pl.BlockSpec((tm_eff, Dout), lambda i: (i, 0)),
            scratch_shapes=[pltpu.VMEM((tm_eff, Dout), jnp.float32)],
        ),
        compiler_params=pltpu.CompilerParams(
            # "parallel" token axis -> shards grid steps across v7x's 2 TCs.
            dimension_semantics=("parallel",),
            # Explicit VMEM budget: raises v5e's 16 MiB default, stays within
            # the v6e/v7x scoped defaults.
            vmem_limit_bytes=32 * 1024 * 1024,
        ),
        cost_estimate=cost,
    )(x_bf, fused_w, gate_b2, expert_b2)

    out = out[:T]
    return out.reshape(*inputs.shape[:-1], Dout)


def _reference(inputs, gate_w, gate_b, expert_w, expert_b, threshold):
    """Pure-JAX reference mirroring the PyTorch forward.

    Matmul operands are cast to bf16 (same policy as the kernel) with f32
    accumulation, so the discrete threshold decision is taken on the same
    logits; gating / renorm math is exact f32.
    """
    D = inputs.shape[-1]
    flat = inputs.reshape(-1, D)
    xb = flat.astype(jnp.bfloat16)
    logits = jnp.dot(xb, gate_w.astype(jnp.bfloat16),
                     preferred_element_type=jnp.float32) + gate_b
    probs = jax.nn.softmax(logits, axis=-1)
    sel = (probs >= threshold).astype(jnp.float32)
    w = probs * sel
    ws = jnp.sum(w, axis=-1, keepdims=True)
    ws = jnp.where(ws == 0.0, jnp.ones_like(ws), ws)
    w = w / ws
    ys = jnp.einsum("td,edo->teo", xb, expert_w.astype(jnp.bfloat16),
                    preferred_element_type=jnp.float32) + expert_b[None, :, :]
    out = jnp.einsum("te,teo->to", w, ys)
    return out.reshape(*inputs.shape[:-1], expert_w.shape[-1])


if __name__ == "__main__":
    # Small deterministic setup: batch=2, seq=8, hidden=32, experts=4.
    key = jax.random.PRNGKey(0)
    k_x, k_gw, k_gb, k_ew, k_eb = jax.random.split(key, 5)

    B, S, D = 2, 8, 32
    E, Dout = 4, 32
    threshold = 0.2

    x = jax.random.normal(k_x, (B, S, D), dtype=jnp.float32)
    gate_w = jax.random.normal(k_gw, (D, E), dtype=jnp.float32) * (1.0 / D ** 0.5)
    gate_b = jax.random.normal(k_gb, (E,), dtype=jnp.float32) * 0.01
    expert_w = jax.random.normal(k_ew, (E, D, Dout), dtype=jnp.float32) * (1.0 / D ** 0.5)
    expert_b = jax.random.normal(k_eb, (E, Dout), dtype=jnp.float32) * 0.01

    out = threshold_moe(x, gate_w, gate_b, expert_w, expert_b, threshold)
    out = jax.block_until_ready(out)

    ref = _reference(x, gate_w, gate_b, expert_w, expert_b, threshold)
    assert out.shape == (B, S, Dout), out.shape
    max_err = float(jnp.max(jnp.abs(out - ref)))
    assert jnp.allclose(out, ref, atol=3e-2, rtol=3e-2), (
        f"mismatch vs reference (max |err| = {max_err})")

    print("KERNEL_OK")
</pallas_src>

<mosaic_0001>
module attributes {stable_mosaic.version = 11 : i64} {
  func.func @_moe_kernel(%arg0: i32, %arg1: memref<16x32xbf16, #tpu.memory_space<vmem>>, %arg2: memref<32x132xbf16, #tpu.memory_space<vmem>>, %arg3: memref<1x4xf32, #tpu.memory_space<vmem>>, %arg4: memref<4x32xf32, #tpu.memory_space<vmem>>, %arg5: memref<16x32xf32, #tpu.memory_space<vmem>>, %arg6: memref<16x32xf32, #tpu.memory_space<vmem>>) attributes {dimension_semantics = [#tpu.dimension_semantics<parallel>], iteration_bounds = array<i64: 1>, scalar_prefetch = 0 : i64, scratch_operands = 1 : i64, tpu.core_type = #tpu.core_type<tc>, window_params = [{transform_indices = @transform_0, window_bounds = array<i64: 16, 32>}, {pipeline_mode = #tpu.pipeline_mode<synchronous>, transform_indices = @transform_1, window_bounds = array<i64: 32, 132>}, {pipeline_mode = #tpu.pipeline_mode<synchronous>, transform_indices = @transform_2, window_bounds = array<i64: 1, 4>}, {pipeline_mode = #tpu.pipeline_mode<synchronous>, transform_indices = @transform_3, window_bounds = array<i64: 4, 32>}, {transform_indices = @transform_4, window_bounds = array<i64: 16, 32>}]} {
    %c0 = arith.constant 0 : index
    %c0_0 = arith.constant 0 : index
    %0 = vector.load %arg1[%c0, %c0_0] : memref<16x32xbf16, #tpu.memory_space<vmem>>, vector<16x32xbf16>
    %c0_1 = arith.constant 0 : index
    %c0_2 = arith.constant 0 : index
    %1 = vector.load %arg2[%c0_1, %c0_2] : memref<32x132xbf16, #tpu.memory_space<vmem>>, vector<32x132xbf16>
    %cst = arith.constant dense<0.000000e+00> : vector<16x132xf32>
    %2 = tpu.matmul %0, %1, %cst {dimension_numbers = #tpu.dot_dimension_numbers<[1], [0], [0], [1], [0, 0, 1, 1], [], []>} : vector<16x32xbf16>, vector<32x132xbf16>, vector<16x132xf32> -> vector<16x132xf32>
    %3 = vector.extract_strided_slice %2 {offsets = [0, 128], sizes = [16, 4], strides = [1, 1]} : vector<16x132xf32> to vector<16x4xf32>
    %c0_3 = arith.constant 0 : index
    %c0_4 = arith.constant 0 : index
    %4 = vector.load %arg3[%c0_3, %c0_4] : memref<1x4xf32, #tpu.memory_space<vmem>>, vector<1x4xf32>
    %5 = vector.broadcast %4 : vector<1x4xf32> to vector<16x4xf32>
    %6 = arith.addf %3, %5 : vector<16x4xf32>
    %cst_5 = arith.constant dense<0xFF800000> : vector<16xf32>
    %7 = vector.multi_reduction <maximumf>, %6, %cst_5 [1] : vector<16x4xf32> to vector<16xf32>
    %8 = vector.shape_cast %7 : vector<16xf32> to vector<16x1xf32>
    %9 = vector.broadcast %8 : vector<16x1xf32> to vector<16x4xf32>
    %10 = arith.subf %6, %9 : vector<16x4xf32>
    %11 = math.exp %10 : vector<16x4xf32>
    %cst_6 = arith.constant dense<0.000000e+00> : vector<16xf32>
    %12 = vector.multi_reduction <add>, %11, %cst_6 [1] : vector<16x4xf32> to vector<16xf32>
    %13 = vector.shape_cast %12 : vector<16xf32> to vector<16x1xf32>
    %cst_7 = arith.constant 2.000000e-01 : f32
    %14 = vector.broadcast %cst_7 : f32 to vector<16x1xf32>
    %15 = arith.mulf %14, %13 : vector<16x1xf32>
    %16 = vector.broadcast %15 : vector<16x1xf32> to vector<16x4xf32>
    %17 = arith.cmpf oge, %11, %16 : vector<16x4xf32>
    %18 = arith.extui %17 : vector<16x4xi1> to vector<16x4xi32>
    %19 = arith.sitofp %18 : vector<16x4xi32> to vector<16x4xf32>
    %20 = arith.mulf %11, %19 : vector<16x4xf32>
    %cst_8 = arith.constant dense<0.000000e+00> : vector<16xf32>
    %21 = vector.multi_reduction <add>, %20, %cst_8 [1] : vector<16x4xf32> to vector<16xf32>
    %22 = vector.shape_cast %21 : vector<16xf32> to vector<16x1xf32>
    %cst_9 = arith.constant 0.000000e+00 : f32
    %23 = vector.broadcast %cst_9 : f32 to vector<16x1xf32>
    %24 = arith.cmpf oeq, %22, %23 : vector<16x1xf32>
    %cst_10 = arith.constant 1.000000e+00 : f32
    %25 = vector.broadcast %cst_10 : f32 to vector<16x1xf32>
    %26 = arith.select %24, %25, %22 : vector<16x1xi1>, vector<16x1xf32>
    %27 = tpu.reciprocal %26 {approx = true} : vector<16x1xf32> -> vector<16x1xf32>
    %28 = vector.broadcast %27 : vector<16x1xf32> to vector<16x4xf32>
    %29 = arith.mulf %20, %28 : vector<16x4xf32>
    %c0_11 = arith.constant 0 : index
    %c0_12 = arith.constant 0 : index
    %30 = vector.load %arg4[%c0_11, %c0_12] : memref<4x32xf32, #tpu.memory_space<vmem>>, vector<4x32xf32>
    %cst_13 = arith.constant dense<0.000000e+00> : vector<16x32xf32>
    %31 = tpu.matmul %29, %30, %cst_13 {dimension_numbers = #tpu.dot_dimension_numbers<[1], [0], [0], [1], [0, 0, 1, 1], [], []>} : vector<16x4xf32>, vector<4x32xf32>, vector<16x32xf32> -> vector<16x32xf32>
    %c0_14 = arith.constant 0 : index
    %c0_15 = arith.constant 0 : index
    %32 = vector.load %arg6[%c0_14, %c0_15] : memref<16x32xf32, #tpu.memory_space<vmem>>, vector<16x32xf32>
    tpu.vector_store %arg6[%c0_14, %c0_15], %31 {strides = array<i32>} : memref<16x32xf32, #tpu.memory_space<vmem>>, vector<16x32xf32>,
    %c0_16 = arith.constant 0 : index
    %c0_17 = arith.constant 0 : index
    %33 = vector.load %arg6[%c0_16, %c0_17] : memref<16x32xf32, #tpu.memory_space<vmem>>, vector<16x32xf32>
    %34 = vector.extract_strided_slice %29 {offsets = [0, 0], sizes = [16, 1], strides = [1, 1]} : vector<16x4xf32> to vector<16x1xf32>
    %35 = vector.extract_strided_slice %2 {offsets = [0, 0], sizes = [16, 32], strides = [1, 1]} : vector<16x132xf32> to vector<16x32xf32>
    %36 = vector.broadcast %34 : vector<16x1xf32> to vector<16x32xf32>
    %37 = arith.mulf %36, %35 : vector<16x32xf32>
    %38 = arith.addf %33, %37 : vector<16x32xf32>
    %c0_18 = arith.constant 0 : index
    %c0_19 = arith.constant 0 : index
    %39 = vector.load %arg6[%c0_18, %c0_19] : memref<16x32xf32, #tpu.memory_space<vmem>>, vector<16x32xf32>
    tpu.vector_store %arg6[%c0_18, %c0_19], %38 {strides = array<i32>} : memref<16x32xf32, #tpu.memory_space<vmem>>, vector<16x32xf32>,
    %c0_20 = arith.constant 0 : index
    %c0_21 = arith.constant 0 : index
    %40 = vector.load %arg6[%c0_20, %c0_21] : memref<16x32xf32, #tpu.memory_space<vmem>>, vector<16x32xf32>
    %41 = vector.extract_strided_slice %29 {offsets = [0, 1], sizes = [16, 1], strides = [1, 1]} : vector<16x4xf32> to vector<16x1xf32>
    %42 = vector.extract_strided_slice %2 {offsets = [0, 32], sizes = [16, 32], strides = [1, 1]} : vector<16x132xf32> to vector<16x32xf32>
    %43 = vector.broadcast %41 : vector<16x1xf32> to vector<16x32xf32>
    %44 = arith.mulf %43, %42 : vector<16x32xf32>
    %45 = arith.addf %40, %44 : vector<16x32xf32>
    %c0_22 = arith.constant 0 : index
    %c0_23 = arith.constant 0 : index
    %46 = vector.load %arg6[%c0_22, %c0_23] : memref<16x32xf32, #tpu.memory_space<vmem>>, vector<16x32xf32>
    tpu.vector_store %arg6[%c0_22, %c0_23], %45 {strides = array<i32>} : memref<16x32xf32, #tpu.memory_space<vmem>>, vector<16x32xf32>,
    %c0_24 = arith.constant 0 : index
    %c0_25 = arith.constant 0 : index
    %47 = vector.load %arg6[%c0_24, %c0_25] : memref<16x32xf32, #tpu.memory_space<vmem>>, vector<16x32xf32>
    %48 = vector.extract_strided_slice %29 {offsets = [0, 2], sizes = [16, 1], strides = [1, 1]} : vector<16x4xf32> to vector<16x1xf32>
    %49 = vector.extract_strided_slice %2 {offsets = [0, 64], sizes = [16, 32], strides = [1, 1]} : vector<16x132xf32> to vector<16x32xf32>
    %50 = vector.broadcast %48 : vector<16x1xf32> to vector<16x32xf32>
    %51 = arith.mulf %50, %49 : vector<16x32xf32>
    %52 = arith.addf %47, %51 : vector<16x32xf32>
    %c0_26 = arith.constant 0 : index
    %c0_27 = arith.constant 0 : index
    %53 = vector.load %arg6[%c0_26, %c0_27] : memref<16x32xf32, #tpu.memory_space<vmem>>, vector<16x32xf32>
    tpu.vector_store %arg6[%c0_26, %c0_27], %52 {strides = array<i32>} : memref<16x32xf32, #tpu.memory_space<vmem>>, vector<16x32xf32>,
    %c0_28 = arith.constant 0 : index
    %c0_29 = arith.constant 0 : index
    %54 = vector.load %arg6[%c0_28, %c0_29] : memref<16x32xf32, #tpu.memory_space<vmem>>, vector<16x32xf32>
    %55 = vector.extract_strided_slice %29 {offsets = [0, 3], sizes = [16, 1], strides = [1, 1]} : vector<16x4xf32> to vector<16x1xf32>
    %56 = vector.extract_strided_slice %2 {offsets = [0, 96], sizes = [16, 32], strides = [1, 1]} : vector<16x132xf32> to vector<16x32xf32>
    %57 = vector.broadcast %55 : vector<16x1xf32> to vector<16x32xf32>
    %58 = arith.mulf %57, %56 : vector<16x32xf32>
    %59 = arith.addf %54, %58 : vector<16x32xf32>
    %c0_30 = arith.constant 0 : index
    %c0_31 = arith.constant 0 : index
    %60 = vector.load %arg6[%c0_30, %c0_31] : memref<16x32xf32, #tpu.memory_space<vmem>>, vector<16x32xf32>
    tpu.vector_store %arg6[%c0_30, %c0_31], %59 {strides = array<i32>} : memref<16x32xf32, #tpu.memory_space<vmem>>, vector<16x32xf32>,
    %c0_32 = arith.constant 0 : index
    %c0_33 = arith.constant 0 : index
    %61 = vector.load %arg6[%c0_32, %c0_33] : memref<16x32xf32, #tpu.memory_space<vmem>>, vector<16x32xf32>
    %c0_34 = arith.constant 0 : index
    %c0_35 = arith.constant 0 : index
    %62 = vector.load %arg5[%c0_34, %c0_35] : memref<16x32xf32, #tpu.memory_space<vmem>>, vector<16x32xf32>
    tpu.vector_store %arg5[%c0_34, %c0_35], %61 {strides = array<i32>} : memref<16x32xf32, #tpu.memory_space<vmem>>, vector<16x32xf32>,
    return
  }
  func.func @transform_0(%arg0: i32) -> (i32, i32) {
    %c0_i32 = arith.constant 0 : i32
    %c0_i32_0 = arith.constant 0 : i32
    return %arg0, %c0_i32 : i32, i32
  }
  func.func @transform_1(%arg0: i32) -> (i32, i32) {
    %c0_i32 = arith.constant 0 : i32
    %c0_i32_0 = arith.constant 0 : i32
    %c0_i32_1 = arith.constant 0 : i32
    return %c0_i32, %c0_i32_0 : i32, i32
  }
  func.func @transform_2(%arg0: i32) -> (i32, i32) {
    %c0_i32 = arith.constant 0 : i32
    %c0_i32_0 = arith.constant 0 : i32
    %c0_i32_1 = arith.constant 0 : i32
    return %c0_i32, %c0_i32_0 : i32, i32
  }
  func.func @transform_3(%arg0: i32) -> (i32, i32) {
    %c0_i32 = arith.constant 0 : i32
    %c0_i32_0 = arith.constant 0 : i32
    %c0_i32_1 = arith.constant 0 : i32
    return %c0_i32, %c0_i32_0 : i32, i32
  }
  func.func @transform_4(%arg0: i32) -> (i32, i32) {
    %c0_i32 = arith.constant 0 : i32
    %c0_i32_0 = arith.constant 0 : i32
    return %arg0, %c0_i32 : i32, i32
  }
}

</mosaic_0001>

<llo_original>
// kernel: tpu_custom_call.1
$region0: #{tpu_custom_call.1}
  #allocation0 [shape = 'u32[]', space=smem, size = 0x4, offset = 0x4, fixed_abs, tag = 'smem constant byte address 0x4 - core index']
  #allocation1 [shape = 'u32[72,128]{1,0:T(1,128)}', space=vmem, size = 0x9000, scoped, tag = 'internal scratch']
  #allocation2 [shape = 'f32[16,32]{1,0:T(8,128)}', space=vmem, size = 0x2000, scoped, tag = 'scratch operand']
  %s0 = inlined_call_operand.hbm [shape: bf16[16,32], index: 0, kind: input, shape index: {}]
  %s1 = inlined_call_operand.hbm [shape: bf16[32,132], index: 1, kind: input, shape index: {}]
  %s2 = inlined_call_operand.vmem [shape: f32[1,4], index: 2, kind: input, shape index: {}]
  %s3 = inlined_call_operand.hbm [shape: f32[4,32], index: 3, kind: input, shape index: {}]
  %s4 = inlined_call_operand.hbm [shape: f32[16,32], index: 4, kind: output, shape index: {}]
  %s5 = sld [smem:[#allocation0]]
  $region38: #{tpu_custom_call.1} parent=0
    _
  %s7 = ssub.s32 1, %s5
  %s8 = scalar_select 0, %s7, %s5
  $region1: #{tpu_custom_call.1} parent=0
    #allocation3 [shape = 'u8[4096]{0}', space=vmem, size = 0x1000, scoped, tag = 'input window, operand 0, single buffered']
    #allocation4 [shape = 's32[1]{0}', space=sflag, size = 0x4, scoped, tag = 'scoped memory for tpu_custom_call.1']
    #allocation5 [shape = 's32[1]{0}', space=sflag, size = 0x4, scoped, tag = 'scoped memory for tpu_custom_call.1']
    #allocation6 [shape = 'u8[16384]{0}', space=vmem, size = 0x4000, scoped, tag = 'input window, operand 1, single buffered']
    #allocation7 [shape = 's32[1]{0}', space=sflag, size = 0x4, scoped, tag = 'scoped memory for tpu_custom_call.1']
    #allocation8 [shape = 'u8[2048]{0}', space=vmem, size = 0x800, scoped, tag = 'input window, operand 3, single buffered']
    #allocation9 [shape = 'u8[8192]{0}', space=vmem, size = 0x2000, scoped, tag = 'output window, operand 0, single buffered']
    %9 = vsyncpa [#allocation4], 0
    %10 = vsyncpa [#allocation7], 0
    %11 = vsyncpa [#allocation5], 0
    // Predicated region
    $region2: #{tpu_custom_call.1} parent=1 // pred_check
      _
    $region3: #{tpu_custom_call.1} parent=1 // pred_check_branch
      %13 = sbr.rel (0) target = $region5
    $region4: #{tpu_custom_call.1} parent=1 // pred_region
      %15 = vsyncadd [#allocation4], 0
      %s16 = sshll.u32 %s0, 4
      %s17 = int_to_ptr.hbm [resolvable:$true] %s16
      %s18 = sshll.u32 [#allocation3], 4
      %s19 = int_to_ptr.vmem [resolvable:$true] %s18
      %24 = dma.hbm_to_vmem [thread:$0]  %s17, 128, %s19, [#allocation4], 64, 64, 4
    $region5: #{tpu_custom_call.1} parent=1 // pred_fallthru
      _
    // Predicated region
    $region6: #{tpu_custom_call.1} parent=1 // pred_check
      _
    $region7: #{tpu_custom_call.1} parent=1 // pred_check_branch
      %26 = sbr.rel (0) target = $region9
    $region8: #{tpu_custom_call.1} parent=1 // pred_region
      %28 = vsyncadd [#allocation7], 0
      %s29 = sshll.u32 %s1, 4
      %s30 = int_to_ptr.hbm [resolvable:$true] %s29
      %s31 = sshll.u32 [#allocation6], 4
      %s32 = int_to_ptr.vmem [resolvable:$true] %s31
      %37 = dma.hbm_to_vmem [thread:$0]  %s30, 512, %s32, [#allocation7], 128, 128, 8
    $region9: #{tpu_custom_call.1} parent=1 // pred_fallthru
      _
    // Predicated region
    $region10: #{tpu_custom_call.1} parent=1 // pred_check
      _
    $region11: #{tpu_custom_call.1} parent=1 // pred_check_branch
      %39 = sbr.rel (0) target = $region13
    $region12: #{tpu_custom_call.1} parent=1 // pred_region
      _
    $region13: #{tpu_custom_call.1} parent=1 // pred_fallthru
      _
    // Predicated region
    $region14: #{tpu_custom_call.1} parent=1 // pred_check
      _
    $region15: #{tpu_custom_call.1} parent=1 // pred_check_branch
      %41 = sbr.rel (0) target = $region17
    $region16: #{tpu_custom_call.1} parent=1 // pred_region
      %43 = vsyncadd [#allocation7], 0
      %s45 = sshll.u32 %s3, 4
      %s46 = int_to_ptr.hbm [resolvable:$true] %s45
      %s47 = sshll.u32 [#allocation8], 4
      %s48 = int_to_ptr.vmem [resolvable:$true] %s47
      %50 = dma.hbm_to_vmem [thread:$0]  %s46, 64, %s48, [#allocation7]
    $region17: #{tpu_custom_call.1} parent=1 // pred_fallthru
      _
    // Predicated region
    $region18: #{tpu_custom_call.1} parent=1 // pred_check
      _
    $region19: #{tpu_custom_call.1} parent=1 // pred_check_branch
      %52 = sbr.rel (0) target = $region21
    $region20: #{tpu_custom_call.1} parent=1 // pred_region
      %54 = dma.done [#allocation4], 128
    $region21: #{tpu_custom_call.1} parent=1 // pred_fallthru
      _
    // Predicated region
    $region22: #{tpu_custom_call.1} parent=1 // pred_check
      _
    $region23: #{tpu_custom_call.1} parent=1 // pred_check_branch
      %56 = sbr.rel (0) target = $region25
    $region24: #{tpu_custom_call.1} parent=1 // pred_region
      %58 = dma.done [#allocation7], 512
    $region25: #{tpu_custom_call.1} parent=1 // pred_fallthru
      _
    // Predicated region
    $region26: #{tpu_custom_call.1} parent=1 // pred_check
      _
    $region27: #{tpu_custom_call.1} parent=1 // pred_check_branch
      %60 = sbr.rel (0) target = $region29
    $region28: #{tpu_custom_call.1} parent=1 // pred_region
      %62 = dma.done [#allocation7], 64
    $region29: #{tpu_custom_call.1} parent=1 // pred_fallthru
      _
    %v64 = vld [vmem:[#allocation3] sm:$0xf]
    %v65 = vld [vmem:[#allocation3 + $0x4] sm:$0xf]
    %v66 = vld [vmem:[#allocation6] sm:$0xff]
    %v67 = vld [vmem:[#allocation6 + $0x8] sm:$0xff]
    %v68 = vld [vmem:[#allocation6 + $0x10] sm:$0xff]
    %v69 = vld [vmem:[#allocation6 + $0x18] sm:$0xff]
    %v72 = vunpack.c.l.b16 %v64
    %v73 = vunpack.c.l.b16 %v65
    %v74 = vpack.c.b16 %v73, %v72
    %v79 = vunpack.c.l.b16 %v66
    %v80 = vunpack.c.h.b16 %v66
    %v81 = vunpack.c.l.b16 %v67
    %v82 = vunpack.c.h.b16 %v67
    %v83 = vunpack.c.l.b16 %v68
    %v84 = vunpack.c.h.b16 %v68
    %v85 = vunpack.c.l.b16 %v69
    %v86 = vunpack.c.h.b16 %v69
    %v87 = vpack.c.b16 %v81, %v79
    %v88 = vpack.c.b16 %v82, %v80
    %v89 = vpack.c.b16 %v85, %v83
    %v90 = vpack.c.b16 %v86, %v84
    %vm95 = vcmask 261120
    %v97 = vsel %vm95, %v74, 0
    %99 = vmatpush.bf16.msra.mxu0 0
    %100 = vmatpush.bf16.msra.mxu0 0
    %101 = vmatpush.bf16.msra.mxu0 0
    %102 = vmatpush.bf16.msra.mxu0 0
    %103 = vmatpush.bf16.msra.mxu0 0
    %104 = vmatpush.bf16.msra.mxu0 0
    %105 = vmatpush.bf16.msra.mxu0 %v89
    %106 = vmatpush.bf16.msra.mxu0 %v87
    %107 = vmatmul.bf16.gmra.mxu0 %v97
    %v108 = vpop.f32.mrf.mxu0
    %v109 = vadd.f32 0.0, %v108
    %v110 = vpop.f32.mrf.mxu0
    %v111 = vadd.f32 0.0, %v110
    %112 = vdwg.mxu0
    %113 = vmatpush.bf16.msra.mxu0 0
    %114 = vmatpush.bf16.msra.mxu0 0
    %115 = vmatpush.bf16.msra.mxu0 0
    %116 = vmatpush.bf16.msra.mxu0 0
    %117 = vmatpush.bf16.msra.mxu0 0
    %118 = vmatpush.bf16.msra.mxu0 0
    %119 = vmatpush.bf16.msra.mxu0 %v90
    %120 = vmatpush.bf16.msra.mxu0 %v88
    %121 = vmatmul.bf16.gmra.mxu0 %v97
    %v122 = vpop.f32.mrf.mxu0
    %v123 = vadd.f32 0.0, %v122
    %v124 = vpop.f32.mrf.mxu0
    %v125 = vadd.f32 0.0, %v124
    %126 = vdwg.mxu0
    %v127 = vld [vmem:[%s2] sm:$0x1]
    %v129 = vperm.slane %v127, 0
    %v131 = vadd.f32 %v123, %v129
    %v132 = vadd.f32 %v125, %v129
    %vm133 = vcmask 31744
    %v134 = vsel %vm133, %v131, -inf
    %135 = vmax.xlane.f32.xlu0 %v134
    %v136 = vpop.xlane.xlu0 %135
    %v137 = vsel %vm133, %v132, -inf
    %138 = vmax.xlane.f32.xlu0 %v137
    %v139 = vpop.xlane.xlu0 %138
    %v140 = vsub.f32 %v131, %v136
    %v141 = vsub.f32 %v132, %v139
    %v142 = vmul.f32 %v140, 1.442695
    %v143 = vpow.pop %v142
    %v144 = vmul.f32 %v141, 1.442695
    %v145 = vpow.pop %v144
    %v146 = vsel %vm133, %v143, 0.0
    %147 = vadd.xlane.f32.xlu0 %v146
    %v148 = vpop.xlane.xlu0 %147
    %v149 = vsel %vm133, %v145, 0.0
    %150 = vadd.xlane.f32.xlu0 %v149
    %v151 = vpop.xlane.xlu0 %150
    %v152 = vmul.f32 %v148, 0.2
    %v153 = vmul.f32 %v151, 0.2
    %vm154 = vcmp.ge.f32.partialorder %v143, %v152
    %vm155 = vcmp.ge.f32.partialorder %v145, %v153
    %v156 = vsel %vm154, 1, 0
    %v157 = vsel %vm155, 1, 0
    %v158 = vcvt.s32.f32 %v156
    %v159 = vcvt.s32.f32 %v157
    %v160 = vmul.f32 %v143, %v158
    %v161 = vmul.f32 %v145, %v159
    %v162 = vsel %vm133, %v160, 0.0
    %163 = vadd.xlane.f32.xlu0 %v162
    %v164 = vpop.xlane.xlu0 %163
    %v165 = vsel %vm133, %v161, 0.0
    %166 = vadd.xlane.f32.xlu0 %v165
    %v167 = vpop.xlane.xlu0 %166
    %vm168 = vcmp.eq.f32.partialorder %v164, 0.0
    %vm169 = vcmp.eq.f32.partialorder %v167, 0.0
    %v170 = vsel %vm168, 1.0, %v164
    %v171 = vsel %vm169, 1.0, %v167
    %v172 = vrcp.pop %v170
    %v173 = vrcp.pop %v171
    %v174 = vmul.f32 %v160, %v172
    %v175 = vmul.f32 %v161, %v173
    %v176 = vld [vmem:[#allocation8] sm:$0xf]
    %v178 = vsel %vm133, %v174, 0
    %v181 = vsel %vm133, %v175, 0
    %vm183 = vcmask 1043456
    %v185 = vsel %vm183, %v176, 0
    %187 = vmatpush.msra.mxu0 0.0
    %188 = vmatpush.msra.mxu0 0.0
    %189 = vmatpush.msra.mxu0 0.0
    %190 = vmatpush.msra.mxu0 0.0
    %191 = vmatpush.msra.mxu0 0.0
    %192 = vmatpush.msra.mxu0 0.0
    %193 = vmatpush.msra.mxu0 0.0
    %194 = vmatpush.msra.mxu0 0.0
    %195 = vmatpush.msra.mxu0 0.0
    %196 = vmatpush.msra.mxu0 0.0
    %197 = vmatpush.msra.mxu0 0.0
    %198 = vmatpush.msra.mxu0 0.0
    %199 = vmatpush.msra.mxu0 0.0
    %200 = vmatpush.msra.mxu0 0.0
    %201 = vmatpush.msra.mxu0 0.0
    %202 = vmatpush.msra.mxu0 %v185
    %203 = vmatmul.f32.gmra.mxu0 %v178
    %v204 = vpop.f32.mrf.mxu0
    %v205 = vadd.f32 0.0, %v204
    %206 = vmatmul.f32.gmra.mxu0 %v181
    %v207 = vpop.f32.mrf.mxu0
    %v208 = vadd.f32 0.0, %v207
    %209 = vdwg.mxu0
    %210 = vst.msk [vmem:[#allocation2] sm:$0xff] %vm95, %v205
    %211 = vst.msk [vmem:[#allocation2 + $0x8] sm:$0xff] %vm95, %v208
    %v212 = vld [vmem:[#allocation2] sm:$0xff]
    %v213 = vld [vmem:[#allocation2 + $0x8] sm:$0xff]
    %214 = vset.pattern.permute.xlu0 0
    %215 = vperm.xlu0 %214, %v174
    %v216 = vpop.permute.xlu0 %215
    %218 = vset.pattern.permute.xlu0 0
    %219 = vperm.xlu0 %218, %v175
    %v220 = vpop.permute.xlu0 %219
    %v222 = vmul.f32 %v216, %v109
    %v223 = vmul.f32 %v220, %v111
    %v224 = vadd.f32 %v212, %v222
    %v225 = vadd.f32 %v213, %v223
    %226 = vst.msk [vmem:[#allocation2] sm:$0xff] %vm95, %v224
    %227 = vst.msk [vmem:[#allocation2 + $0x8] sm:$0xff] %vm95, %v225
    %v228 = vld [vmem:[#allocation2] sm:$0xff]
    %v229 = vld [vmem:[#allocation2 + $0x8] sm:$0xff]
    %230 = vset.pattern.permute.xlu0 1
    %231 = vperm.xlu0 %230, %v174
    %v232 = vpop.permute.xlu0 %231
    %234 = vset.pattern.permute.xlu0 1
    %235 = vperm.xlu0 %234, %v175
    %v236 = vpop.permute.xlu0 %235
    %v238 = vmul.f32 %v232, %v109
    %v239 = vmul.f32 %v236, %v111
    %242 = vrot.lane.b32.xlu0 %v238, 96
    %v243 = vpop.permute.xlu0 %242
    %244 = vrot.lane.b32.xlu0 %v239, 96
    %v245 = vpop.permute.xlu0 %244
    %v248 = vadd.f32 %v228, %v243
    %v249 = vadd.f32 %v229, %v245
    %250 = vst.msk [vmem:[#allocation2] sm:$0xff] %vm95, %v248
    %251 = vst.msk [vmem:[#allocation2 + $0x8] sm:$0xff] %vm95, %v249
    %v252 = vld [vmem:[#allocation2] sm:$0xff]
    %v253 = vld [vmem:[#allocation2 + $0x8] sm:$0xff]
    %254 = vset.pattern.permute.xlu0 2
    %255 = vperm.xlu0 %254, %v174
    %v256 = vpop.permute.xlu0 %255
    %258 = vset.pattern.permute.xlu0 2
    %259 = vperm.xlu0 %258, %v175
    %v260 = vpop.permute.xlu0 %259
    %v262 = vmul.f32 %v256, %v109
    %v263 = vmul.f32 %v260, %v111
    %266 = vrot.lane.b32.xlu0 %v262, 64
    %v267 = vpop.permute.xlu0 %266
    %268 = vrot.lane.b32.xlu0 %v263, 64
    %v269 = vpop.permute.xlu0 %268
    %v272 = vadd.f32 %v252, %v267
    %v273 = vadd.f32 %v253, %v269
    %274 = vst.msk [vmem:[#allocation2] sm:$0xff] %vm95, %v272
    %275 = vst.msk [vmem:[#allocation2 + $0x8] sm:$0xff] %vm95, %v273
    %v276 = vld [vmem:[#allocation2] sm:$0xff]
    %v277 = vld [vmem:[#allocation2 + $0x8] sm:$0xff]
    %278 = vset.pattern.permute.xlu0 3
    %279 = vperm.xlu0 %278, %v174
    %v280 = vpop.permute.xlu0 %279
    %282 = vset.pattern.permute.xlu0 3
    %283 = vperm.xlu0 %282, %v175
    %v284 = vpop.permute.xlu0 %283
    %v286 = vmul.f32 %v280, %v109
    %v287 = vmul.f32 %v284, %v111
    %290 = vrot.lane.b32.xlu0 %v286, 32
    %v291 = vpop.permute.xlu0 %290
    %292 = vrot.lane.b32.xlu0 %v287, 32
    %v293 = vpop.permute.xlu0 %292
    %v296 = vadd.f32 %v276, %v291
    %v297 = vadd.f32 %v277, %v293
    %298 = vst.msk [vmem:[#allocation2] sm:$0xff] %vm95, %v296
    %299 = vst.msk [vmem:[#allocation2 + $0x8] sm:$0xff] %vm95, %v297
    %v300 = vld [vmem:[#allocation2] sm:$0xff]
    %v301 = vld [vmem:[#allocation2 + $0x8] sm:$0xff]
    %302 = vst.msk [vmem:[#allocation9] sm:$0xff] %vm95, %v300
    %303 = vst.msk [vmem:[#allocation9 + $0x8] sm:$0xff] %vm95, %v301
    // Predicated region
    $region30: #{tpu_custom_call.1} parent=1 // pred_check
      _
    $region31: #{tpu_custom_call.1} parent=1 // pred_check_branch
      %305 = sbr.rel (0) target = $region33
    $region32: #{tpu_custom_call.1} parent=1 // pred_region
      %307 = vsyncadd [#allocation5], 0
      %s308 = sshll.u32 [#allocation9], 4
      %s309 = int_to_ptr.vmem [resolvable:$true] %s308
      %s310 = sshll.u32 %s4, 4
      %s311 = int_to_ptr.hbm [resolvable:$true] %s310
      %316 = dma.vmem_to_hbm [thread:$0]  %s309, 256, %s311, [#allocation5], 128, 128, 8
    $region33: #{tpu_custom_call.1} parent=1 // pred_fallthru
      _
    // Predicated region
    $region34: #{tpu_custom_call.1} parent=1 // pred_check
      _
    $region35: #{tpu_custom_call.1} parent=1 // pred_check_branch
      %318 = sbr.rel (0) target = $region37
    $region36: #{tpu_custom_call.1} parent=1 // pred_region
      %320 = dma.done [#allocation5], 256
    $region37: #{tpu_custom_call.1} parent=1 // pred_fallthru
      _
    %321 = vsyncpa [#allocation4], 1
    %322 = vsyncpa [#allocation7], 1
    %323 = vsyncpa [#allocation5], 1

</llo_original>
